<compile_context>
chip_gen: v6e
topology: v6e:2x2x1
jax: 0.10.0
libtpu: 0.0.40
codegen_flags: <defaults>
</compile_context>

<pallas_src>
import jax
import jax.numpy as jnp
from jax import lax
from jax.experimental import pallas as pl
from jax.experimental.pallas import tpu as pltpu

# ---------------- configuration (small synthetic shapes, module-consistent) ----------------
B = 2                                   # batch
QLEN = 8                                # query token length
DLEN = 60                               # doc token length (> MAX_DOC_TOK_LEN -> sbcount == 2)
PROMPT = 8                              # hlen (8 for sublane alignment; 10 in the real module)
H = 256                                 # BERT_SIZE stand-in (768/1024 in the real model)
HSIZE = 256                             # reparameterization hidden size (hsize)
VOCAB = 2048                            # synthetic vocab
MAXLEN = 64                             # stands in for bert max_position_embeddings
DIFF = 3
CLS_ID, SEP_ID = 101, 102


# ---------------- Pallas kernel 1: theta reparameterization MLP (run ONCE, hoisted) ----------------
def _theta_mlp_kernel(theta_ref, w1_ref, b1_ref, w2_ref, b2_ref, out_ref):
    # bf16 operands on the MXU, f32 accumulation; bias/relu in f32 on the VPU.
    h = jnp.dot(theta_ref[...], w1_ref[...], preferred_element_type=jnp.float32)
    h = jnp.maximum(h + b1_ref[...], 0.0)                       # rep_relu
    o = jnp.dot(h.astype(jnp.bfloat16), w2_ref[...],
                preferred_element_type=jnp.float32)
    out_ref[...] = o + b2_ref[...]


def theta_mlp(rep_theta, w1, b1, w2, b2):
    # No grid / no BlockSpecs: whole arrays, single-buffered VMEM blocks, no
    # degenerate grid=(1,) pipelining machinery.
    return pl.pallas_call(
        _theta_mlp_kernel,
        out_shape=jax.ShapeDtypeStruct(rep_theta.shape, jnp.float32),
    )(rep_theta.astype(jnp.bfloat16), w1.astype(jnp.bfloat16), b1,
      w2.astype(jnp.bfloat16), b2)


# ---------------- Pallas kernel 2: fused encoder stand-in ----------------
#   embedding DMA-gather + theta splice + CLS pooling + sub-batch mean + cls head.
def _encoder_kernel(toks_ref,        # SMEM  (nrows, L) int32   scalar prefetch
                    theta_ref,       # VMEM  (PROMPT, H) f32
                    w_ref,           # VMEM  (1, H) f32         cls weight row
                    b_ref,           # SMEM  (1, 1) f32         cls bias
                    embed_hbm,       # ANY   (VOCAB, H) f32     embedding table (stays in HBM)
                    hid_ref,         # out   (L, H) f32         last-hidden row block (leading dim squeezed)
                    score_ref,       # out   (B, 1) f32         written on the last grid step
                    row_buf,         # VMEM scratch (L, H) f32
                    cls_acc,         # VMEM scratch (B, H) f32  sub-batch accumulator
                    sems):           # DMA semaphores (L,)
    r = pl.program_id(0)
    nrows = pl.num_programs(0)
    prompt = theta_ref.shape[0]
    seqlen = row_buf.shape[0]
    batch = score_ref.shape[0]

    @pl.when(r == 0)
    def _():
        cls_acc[...] = jnp.zeros_like(cls_acc)

    # DMA-gather the embedding rows of this sequence (token ids live in SMEM).
    copies = []
    for l in range(prompt, seqlen):
        cp = pltpu.make_async_copy(embed_hbm.at[pl.ds(toks_ref[r, l], 1)],
                                   row_buf.at[pl.ds(l, 1)],
                                   sems.at[l])
        cp.start()
        copies.append(cp)

    # Prompt rows come straight from theta (prompt_inputs_embeds); overlapped with the DMAs.
    row_buf[:prompt, :] = theta_ref[...]

    for cp in copies:
        cp.wait()

    hid_ref[...] = row_buf[...]

    # CLS pooling at position `prompt` + sub-batch accumulation (one-hot row select,
    # avoids dynamic VMEM stores).  Row r is sub-batch r // batch of batch item r % batch.
    cls_row = row_buf[prompt:prompt + 1, :]                               # (1, H)
    b_idx = r % batch
    row_sel = lax.broadcasted_iota(jnp.int32, (batch, 1), 0) == b_idx
    cls_acc[...] = cls_acc[...] + jnp.where(row_sel, cls_row, 0.0)

    @pl.when(r == nrows - 1)
    def _():
        sbcount = nrows // batch
        mean_cls = cls_acc[...] * (1.0 / sbcount)                         # torch .mean(dim=2)
        # 1-wide cls head as a VPU/XLU reduction (no lane-padded MXU weight);
        # dropout(p=0.1) is the identity on the inference path.
        s = jnp.sum(mean_cls * w_ref[...], axis=-1, keepdims=True)        # (B, 1)
        score_ref[...] = s + b_ref[0, 0]


# ---------------- glue: sub-batching (modeling_util.subbatch, static shapes) ----------------
def subbatch(x, maxlen, pad_value):
    dlen = x.shape[1]
    sb = -(-dlen // maxlen)
    if sb == 1:
        return x, 1
    s = -(-dlen // sb)
    chunks = []
    for i in range(sb):
        c = x[:, i * s:(i + 1) * s]
        if c.shape[1] != s:
            c = jnp.pad(c, ((0, 0), (0, s - c.shape[1])), constant_values=pad_value)
        chunks.append(c)
    return jnp.concatenate(chunks, axis=0), sb


# ---------------- glue: prompt/CLS/query/SEP/doc/SEP assembly (static shapes) ----------------
def build_inputs(prompt, query_tok, query_mask, doc_tok, doc_mask):
    batch, qlen = query_tok.shape
    max_doc_tok_len = MAXLEN - qlen - prompt - DIFF
    doc_toks, sbcount = subbatch(doc_tok, max_doc_tok_len, 0)
    doc_masks, _ = subbatch(doc_mask, max_doc_tok_len, 0.0)
    nrows = batch * sbcount

    query_toks = jnp.concatenate([query_tok] * sbcount, axis=0)
    query_masks = jnp.concatenate([query_mask] * sbcount, axis=0)
    prompt_toks = jnp.full((nrows, prompt), 1, jnp.int32)
    prompt_masks = jnp.full((nrows, prompt), 1.0, jnp.float32)

    CLSS = jnp.full((nrows, 1), CLS_ID, jnp.int32)
    SEPS = jnp.full((nrows, 1), SEP_ID, jnp.int32)
    ONES = jnp.ones((nrows, 1), jnp.float32)
    NILS = jnp.zeros((nrows, 1), jnp.float32)

    toks = jnp.concatenate([prompt_toks, CLSS, query_toks, SEPS, doc_toks, SEPS], axis=1)
    mask = jnp.concatenate([prompt_masks, ONES, query_masks, ONES, doc_masks, ONES], axis=1)
    segment_ids = jnp.concatenate([NILS] * (2 + qlen + prompt)
                                  + [ONES] * (1 + doc_toks.shape[1]), axis=1)
    toks = jnp.where(toks == -1, 0, toks).astype(jnp.int32)
    return toks, mask, segment_ids, sbcount


# ---------------- encode + score (single fused pallas_call) ----------------
def encode_and_score(state, query_tok, query_mask, doc_tok, doc_mask):
    batch = query_tok.shape[0]
    theta = state["theta"]
    prompt, hdim = theta.shape
    toks, mask, segment_ids, sbcount = build_inputs(prompt, query_tok, query_mask,
                                                    doc_tok, doc_mask)
    # TODO(synk): the pretrained multi-layer BERT encoder (tokenizer + transformer
    # layers + pretrained weights) has no clean in-script Pallas equivalent; its last
    # hidden state is replaced by the embedding-lookup stand-in below, with theta
    # spliced into the prompt rows (matching prompt_inputs_embeds).  mask/segment_ids
    # are built for fidelity but unused by the stand-in.
    del mask, segment_ids
    nrows, seqlen = toks.shape

    grid_spec = pltpu.PrefetchScalarGridSpec(
        num_scalar_prefetch=1,
        grid=(nrows,),
        in_specs=[
            pl.BlockSpec((prompt, hdim), lambda r, toks_ref: (0, 0)),     # theta
            pl.BlockSpec((1, hdim), lambda r, toks_ref: (0, 0)),          # cls weight row
            pl.BlockSpec(memory_space=pltpu.MemorySpace.SMEM),            # cls bias scalar
            pl.BlockSpec(memory_space=pl.ANY),                            # embedding table (HBM)
        ],
        out_specs=[
            pl.BlockSpec((None, seqlen, hdim), lambda r, toks_ref: (r, 0, 0)),   # last hidden
            pl.BlockSpec((batch, 1), lambda r, toks_ref: (0, 0)),                # score
        ],
        scratch_shapes=[
            pltpu.VMEM((seqlen, hdim), jnp.float32),
            pltpu.VMEM((batch, hdim), jnp.float32),
            pltpu.SemaphoreType.DMA((seqlen,)),
        ],
    )
    hidden, score = pl.pallas_call(
        _encoder_kernel,
        grid_spec=grid_spec,
        out_shape=(jax.ShapeDtypeStruct((nrows, seqlen, hdim), jnp.float32),
                   jax.ShapeDtypeStruct((batch, 1), jnp.float32)),
        compiler_params=pltpu.CompilerParams(
            # cls accumulation is carried across the row axis -> "arbitrary".
            dimension_semantics=("arbitrary",)),
    )(toks, theta, state["w_cls_row"], state["b_cls"], state["embed"])
    return score, hidden, sbcount


# ---------------- forward (mirrors PMonoBertRanker.forward, value_return=False) ----------------
def forward(state, query_tok, query_mask, doc_tok, doc_mask):
    # theta = rep_l2(relu(rep_l1(rep_theta))) is parameter-only; it is computed once
    # in prepare_state() (hoisted) and consumed here via state["theta"].
    score, _, _ = encode_and_score(state, query_tok, query_mask, doc_tok, doc_mask)
    return score                                                          # (B, 1)


# ---------------- parameter-only precomputation (hoisted off the request path) ----------------
def prepare_state(params):
    state = dict(params)
    state["theta"] = theta_mlp(params["rep_theta"], params["w1"], params["b1"],
                               params["w2"], params["b2"])                # Pallas kernel 1
    state["w_cls_row"] = params["w_cls"].reshape(1, -1)                   # (1, H) reduction row
    return state


# ---------------- deterministic parameter init ----------------
def init_params(key):
    ks = jax.random.split(key, 8)
    embed = jax.random.normal(ks[0], (VOCAB, H), jnp.float32) * 0.02
    vmean = jnp.mean(embed)
    vstd = jnp.std(embed)
    # initialize_theta(): normal(vocab mean, vocab std), shape (hlen, BERT_SIZE)
    rep_theta = vmean + vstd * jax.random.normal(ks[1], (PROMPT, H), jnp.float32)

    def lin(k, fan_in, shape):
        bound = fan_in ** -0.5
        return jax.random.uniform(k, shape, jnp.float32, -bound, bound)

    w1 = lin(ks[2], H, (H, HSIZE))        # rep_l1.weight^T
    b1 = lin(ks[3], H, (1, HSIZE))        # rep_l1.bias
    w2 = lin(ks[4], HSIZE, (HSIZE, H))    # rep_l2.weight^T
    b2 = lin(ks[5], HSIZE, (1, H))        # rep_l2.bias
    w_cls = lin(ks[6], H, (H, 1))         # cls.weight^T
    b_cls = lin(ks[7], H, (1, 1))         # cls.bias
    return dict(embed=embed, rep_theta=rep_theta, w1=w1, b1=b1, w2=w2, b2=b2,
                w_cls=w_cls, b_cls=b_cls)


# ---------------- pure-JAX f32 reference (for tolerance validation) ----------------
def reference_forward(params, query_tok, query_mask, doc_tok, doc_mask):
    theta = jnp.maximum(params["rep_theta"] @ params["w1"] + params["b1"], 0.0)
    theta = theta @ params["w2"] + params["b2"]
    prompt = theta.shape[0]
    toks, _, _, sbcount = build_inputs(prompt, query_tok, query_mask, doc_tok, doc_mask)
    hidden = jnp.take(params["embed"], toks, axis=0)
    hidden = hidden.at[:, :prompt, :].set(theta)
    batch = query_tok.shape[0]
    cls = hidden[:, prompt, :].reshape(sbcount, batch, -1).mean(axis=0)
    score = cls @ params["w_cls"] + params["b_cls"]
    return theta, hidden, score


if __name__ == "__main__":
    key = jax.random.PRNGKey(0)
    pkey, qk, dk = jax.random.split(key, 3)
    params = init_params(pkey)
    state = prepare_state(params)            # theta MLP runs exactly once here

    q_lengths = jnp.array([5, 8], jnp.int32)
    d_lengths = jnp.array([40, 60], jnp.int32)
    query_tok = jax.random.randint(qk, (B, QLEN), 1000, 1100, jnp.int32)
    doc_tok = jax.random.randint(dk, (B, DLEN), 990, 1100, jnp.int32)
    query_mask = (jnp.arange(QLEN)[None, :] < q_lengths[:, None]).astype(jnp.float32)
    doc_mask = (jnp.arange(DLEN)[None, :] < d_lengths[:, None]).astype(jnp.float32)
    query_tok = jnp.where(query_mask > 0, query_tok, -1)
    doc_tok = jnp.where(doc_mask > 0, doc_tok, -1)

    # module-equivalent forward (score only)
    score = forward(state, query_tok, query_mask, doc_tok, doc_mask)
    score = jax.block_until_ready(score)
    assert score.shape == (B, 1) and score.dtype == jnp.float32

    # validation against the f32 reference (also checks the DMA-gather + theta splice)
    _, hidden, sbcount = encode_and_score(state, query_tok, query_mask, doc_tok, doc_mask)
    hidden = jax.block_until_ready(hidden)
    assert sbcount == 2

    theta_ref, hidden_ref, score_ref = reference_forward(params, query_tok, query_mask,
                                                         doc_tok, doc_mask)
    assert jnp.allclose(state["theta"], theta_ref, atol=5e-3, rtol=5e-2), "theta mismatch"
    assert jnp.allclose(hidden, hidden_ref, atol=5e-3, rtol=5e-2), "hidden mismatch"
    assert jnp.allclose(score, score_ref, atol=1e-4, rtol=1e-4), "score mismatch"
    print("KERNEL_OK")
</pallas_src>

<mosaic_0001>
module attributes {stable_mosaic.version = 11 : i64} {
  func.func @_theta_mlp_kernel(%arg0: memref<8x256xbf16, #tpu.memory_space<vmem>>, %arg1: memref<256x256xbf16, #tpu.memory_space<vmem>>, %arg2: memref<1x256xf32, #tpu.memory_space<vmem>>, %arg3: memref<256x256xbf16, #tpu.memory_space<vmem>>, %arg4: memref<1x256xf32, #tpu.memory_space<vmem>>, %arg5: memref<8x256xf32, #tpu.memory_space<vmem>>) attributes {dimension_semantics = [], scalar_prefetch = 0 : i64, scratch_operands = 0 : i64, tpu.core_type = #tpu.core_type<tc>} {
    %c0 = arith.constant 0 : index
    %c0_0 = arith.constant 0 : index
    %0 = vector.load %arg0[%c0, %c0_0] : memref<8x256xbf16, #tpu.memory_space<vmem>>, vector<8x256xbf16>
    %c0_1 = arith.constant 0 : index
    %c0_2 = arith.constant 0 : index
    %1 = vector.load %arg1[%c0_1, %c0_2] : memref<256x256xbf16, #tpu.memory_space<vmem>>, vector<256x256xbf16>
    %cst = arith.constant dense<0.000000e+00> : vector<8x256xf32>
    %2 = tpu.matmul %0, %1, %cst {dimension_numbers = #tpu.dot_dimension_numbers<[1], [0], [0], [1], [0, 0, 1, 1], [], []>} : vector<8x256xbf16>, vector<256x256xbf16>, vector<8x256xf32> -> vector<8x256xf32>
    %c0_3 = arith.constant 0 : index
    %c0_4 = arith.constant 0 : index
    %3 = vector.load %arg2[%c0_3, %c0_4] : memref<1x256xf32, #tpu.memory_space<vmem>>, vector<1x256xf32>
    %4 = vector.broadcast %3 : vector<1x256xf32> to vector<8x256xf32>
    %5 = arith.addf %2, %4 : vector<8x256xf32>
    %cst_5 = arith.constant 0.000000e+00 : f32
    %6 = vector.broadcast %cst_5 : f32 to vector<8x256xf32>
    %7 = arith.maximumf %5, %6 : vector<8x256xf32>
    %8 = arith.truncf %7 : vector<8x256xf32> to vector<8x256xbf16>
    %c0_6 = arith.constant 0 : index
    %c0_7 = arith.constant 0 : index
    %9 = vector.load %arg3[%c0_6, %c0_7] : memref<256x256xbf16, #tpu.memory_space<vmem>>, vector<256x256xbf16>
    %cst_8 = arith.constant dense<0.000000e+00> : vector<8x256xf32>
    %10 = tpu.matmul %8, %9, %cst_8 {dimension_numbers = #tpu.dot_dimension_numbers<[1], [0], [0], [1], [0, 0, 1, 1], [], []>} : vector<8x256xbf16>, vector<256x256xbf16>, vector<8x256xf32> -> vector<8x256xf32>
    %c0_9 = arith.constant 0 : index
    %c0_10 = arith.constant 0 : index
    %11 = vector.load %arg4[%c0_9, %c0_10] : memref<1x256xf32, #tpu.memory_space<vmem>>, vector<1x256xf32>
    %12 = vector.broadcast %11 : vector<1x256xf32> to vector<8x256xf32>
    %13 = arith.addf %10, %12 : vector<8x256xf32>
    %c0_11 = arith.constant 0 : index
    %c0_12 = arith.constant 0 : index
    %14 = vector.load %arg5[%c0_11, %c0_12] : memref<8x256xf32, #tpu.memory_space<vmem>>, vector<8x256xf32>
    tpu.vector_store %arg5[%c0_11, %c0_12], %13 {strides = array<i32>} : memref<8x256xf32, #tpu.memory_space<vmem>>, vector<8x256xf32>,
    return
  }
}

</mosaic_0001>

<llo_original>
// kernel: tpu_custom_call.1
$region0: #{tpu_custom_call.1}
  #allocation0 [shape = 'u32[]', space=smem, size = 0x4, offset = 0x4, fixed_abs, tag = 'smem constant byte address 0x4 - core index']
  #allocation1 [shape = 'u32[144,128]{1,0:T(1,128)}', space=vmem, size = 0x12000, scoped, tag = 'internal scratch']
  %s0 = inlined_call_operand.hbm [shape: bf16[8,256], index: 0, kind: input, shape index: {}]
  %s1 = inlined_call_operand.hbm [shape: bf16[256,256], index: 1, kind: input, shape index: {}]
  %s2 = inlined_call_operand.vmem [shape: f32[1,256], index: 2, kind: input, shape index: {}]
  %s3 = inlined_call_operand.hbm [shape: bf16[256,256], index: 3, kind: input, shape index: {}]
  %s4 = inlined_call_operand.vmem [shape: f32[1,256], index: 4, kind: input, shape index: {}]
  %s5 = inlined_call_operand.hbm [shape: f32[8,256], index: 5, kind: output, shape index: {}]
  %s6 = sld [smem:[#allocation0]]
  $region42: #{tpu_custom_call.1} parent=0
    _
  %s8 = ssub.s32 1, %s6
  %s9 = scalar_select 0, %s8, %s6
  $region1: #{tpu_custom_call.1} parent=0
    #allocation2 [shape = 'u8[4096]{0}', space=vmem, size = 0x1000, scoped, tag = 'input window, operand 0, single buffered']
    #allocation3 [shape = 's32[1]{0}', space=sflag, size = 0x4, scoped, tag = 'scoped memory for tpu_custom_call.1']
    #allocation4 [shape = 's32[1]{0}', space=sflag, size = 0x4, scoped, tag = 'scoped memory for tpu_custom_call.1']
    #allocation5 [shape = 'u8[131072]{0}', space=vmem, size = 0x20000, scoped, tag = 'input window, operand 1, single buffered']
    #allocation6 [shape = 's32[1]{0}', space=sflag, size = 0x4, scoped, tag = 'scoped memory for tpu_custom_call.1']
    #allocation7 [shape = 'u8[131072]{0}', space=vmem, size = 0x20000, scoped, tag = 'input window, operand 3, single buffered']
    #allocation8 [shape = 'u8[8192]{0}', space=vmem, size = 0x2000, scoped, tag = 'output window, operand 0, single buffered']
    %10 = vsyncpa [#allocation3], 0
    %11 = vsyncpa [#allocation6], 0
    %12 = vsyncpa [#allocation4], 0
    // Predicated region
    $region2: #{tpu_custom_call.1} parent=1 // pred_check
      _
    $region3: #{tpu_custom_call.1} parent=1 // pred_check_branch
      %14 = sbr.rel (0) target = $region5
    $region4: #{tpu_custom_call.1} parent=1 // pred_region
      %s16 = ssub.s32 128, 128
      %17 = vsyncadd [#allocation3], %s16
      %s19 = sshll.u32 [#allocation2], 4
      %s20 = int_to_ptr.vmem [resolvable:$true] %s19
      %22 = dma.hbm_to_vmem [thread:$0]  %s0, 128, %s20, [#allocation3]
    $region5: #{tpu_custom_call.1} parent=1 // pred_fallthru
      _
    // Predicated region
    $region6: #{tpu_custom_call.1} parent=1 // pred_check
      _
    $region7: #{tpu_custom_call.1} parent=1 // pred_check_branch
      %24 = sbr.rel (0) target = $region9
    $region8: #{tpu_custom_call.1} parent=1 // pred_region
      %s26 = ssub.s32 4096, 4096
      %27 = vsyncadd [#allocation6], %s26
      %s28 = sshll.u32 [#allocation5], 4
      %s29 = int_to_ptr.vmem [resolvable:$true] %s28
      %34 = dma.hbm_to_vmem [thread:$0]  %s1, 4096, %s29, [#allocation6], 128, 128, 8
    $region9: #{tpu_custom_call.1} parent=1 // pred_fallthru
      _
    // Predicated region
    $region10: #{tpu_custom_call.1} parent=1 // pred_check
      _
    $region11: #{tpu_custom_call.1} parent=1 // pred_check_branch
      %36 = sbr.rel (0) target = $region13
    $region12: #{tpu_custom_call.1} parent=1 // pred_region
      _
    $region13: #{tpu_custom_call.1} parent=1 // pred_fallthru
      _
    // Predicated region
    $region14: #{tpu_custom_call.1} parent=1 // pred_check
      _
    $region15: #{tpu_custom_call.1} parent=1 // pred_check_branch
      %38 = sbr.rel (0) target = $region17
    $region16: #{tpu_custom_call.1} parent=1 // pred_region
      %s40 = ssub.s32 4096, 4096
      %41 = vsyncadd [#allocation6], %s40
      %s42 = sshll.u32 [#allocation7], 4
      %s43 = int_to_ptr.vmem [resolvable:$true] %s42
      %48 = dma.hbm_to_vmem [thread:$0]  %s3, 4096, %s43, [#allocation6], 128, 128, 8
    $region17: #{tpu_custom_call.1} parent=1 // pred_fallthru
      _
    // Predicated region
    $region18: #{tpu_custom_call.1} parent=1 // pred_check
      _
    $region19: #{tpu_custom_call.1} parent=1 // pred_check_branch
      %50 = sbr.rel (0) target = $region21
    $region20: #{tpu_custom_call.1} parent=1 // pred_region
      _
    $region21: #{tpu_custom_call.1} parent=1 // pred_fallthru
      _
    // Predicated region
    $region22: #{tpu_custom_call.1} parent=1 // pred_check
      _
    $region23: #{tpu_custom_call.1} parent=1 // pred_check_branch
      %52 = sbr.rel (0) target = $region25
    $region24: #{tpu_custom_call.1} parent=1 // pred_region
      %53 = dma.done [#allocation3], 128
    $region25: #{tpu_custom_call.1} parent=1 // pred_fallthru
      _
    // Predicated region
    $region26: #{tpu_custom_call.1} parent=1 // pred_check
      _
    $region27: #{tpu_custom_call.1} parent=1 // pred_check_branch
      %55 = sbr.rel (0) target = $region29
    $region28: #{tpu_custom_call.1} parent=1 // pred_region
      %56 = dma.done [#allocation6], 4096
    $region29: #{tpu_custom_call.1} parent=1 // pred_fallthru
      _
    // Predicated region
    $region30: #{tpu_custom_call.1} parent=1 // pred_check
      _
    $region31: #{tpu_custom_call.1} parent=1 // pred_check_branch
      %58 = sbr.rel (0) target = $region33
    $region32: #{tpu_custom_call.1} parent=1 // pred_region
      %59 = dma.done [#allocation6], 4096
    $region33: #{tpu_custom_call.1} parent=1 // pred_fallthru
      _
    %v60 = vld [vmem:[#allocation2] sm:$0xff]
    %v61 = vld [vmem:[#allocation5] sm:$0xff]
    %v62 = vld [vmem:[#allocation5 + $0x8] sm:$0xff]
    %v63 = vld [vmem:[#allocation5 + $0x10] sm:$0xff]
    %v64 = vld [vmem:[#allocation5 + $0x18] sm:$0xff]
    %v65 = vld [vmem:[#allocation5 + $0x20] sm:$0xff]
    %v66 = vld [vmem:[#allocation5 + $0x28] sm:$0xff]
    %v67 = vld [vmem:[#allocation5 + $0x30] sm:$0xff]
    %v68 = vld [vmem:[#allocation5 + $0x38] sm:$0xff]
    %v69 = vld [vmem:[#allocation5 + $0x40] sm:$0xff]
    %v70 = vld [vmem:[#allocation5 + $0x48] sm:$0xff]
    %v71 = vld [vmem:[#allocation5 + $0x50] sm:$0xff]
    %v72 = vld [vmem:[#allocation5 + $0x58] sm:$0xff]
    %v73 = vld [vmem:[#allocation5 + $0x60] sm:$0xff]
    %v74 = vld [vmem:[#allocation5 + $0x68] sm:$0xff]
    %v75 = vld [vmem:[#allocation5 + $0x70] sm:$0xff]
    %v76 = vld [vmem:[#allocation5 + $0x78] sm:$0xff]
    %v77 = vld [vmem:[#allocation5 + $0x80] sm:$0xff]
    %v78 = vld [vmem:[#allocation5 + $0x88] sm:$0xff]
    %v79 = vld [vmem:[#allocation5 + $0x90] sm:$0xff]
    %v80 = vld [vmem:[#allocation5 + $0x98] sm:$0xff]
    %v81 = vld [vmem:[#allocation5 + $0xa0] sm:$0xff]
    %v82 = vld [vmem:[#allocation5 + $0xa8] sm:$0xff]
    %v83 = vld [vmem:[#allocation5 + $0xb0] sm:$0xff]
    %v84 = vld [vmem:[#allocation5 + $0xb8] sm:$0xff]
    %v85 = vld [vmem:[#allocation5 + $0xc0] sm:$0xff]
    %v86 = vld [vmem:[#allocation5 + $0xc8] sm:$0xff]
    %v87 = vld [vmem:[#allocation5 + $0xd0] sm:$0xff]
    %v88 = vld [vmem:[#allocation5 + $0xd8] sm:$0xff]
    %v89 = vld [vmem:[#allocation5 + $0xe0] sm:$0xff]
    %v90 = vld [vmem:[#allocation5 + $0xe8] sm:$0xff]
    %v91 = vld [vmem:[#allocation5 + $0xf0] sm:$0xff]
    %v92 = vld [vmem:[#allocation5 + $0xf8] sm:$0xff]
    %v93 = vld [vmem:[%s2] sm:$0x3]
    %v95 = vlaneseq
    %v96 = vshrl.u32 %v95, 7
    %v97 = vsub.s32 0, %v96
    %v98 = vrot.slane %v93, %v97
    %v99 = vlaneseq
    %v100 = vshrl.u32 %v99, 7
    %v101 = vsub.s32 1, %v100
    %v102 = vrot.slane %v93, %v101
    %v106 = vunpack.c.l.b16 %v60
    %v107 = vunpack.c.h.b16 %v60
    %v108 = vpack.c.b16 %v106, %v106
    %v109 = vpack.c.b16 %v107, %v107
    %v144 = vunpack.c.l.b16 %v61
    %v145 = vunpack.c.h.b16 %v61
    %v146 = vunpack.c.l.b16 %v62
    %v147 = vunpack.c.h.b16 %v62
    %v148 = vunpack.c.l.b16 %v63
    %v149 = vunpack.c.h.b16 %v63
    %v150 = vunpack.c.l.b16 %v64
    %v151 = vunpack.c.h.b16 %v64
    %v152 = vunpack.c.l.b16 %v65
    %v153 = vunpack.c.h.b16 %v65
    %v154 = vunpack.c.l.b16 %v66
    %v155 = vunpack.c.h.b16 %v66
    %v156 = vunpack.c.l.b16 %v67
    %v157 = vunpack.c.h.b16 %v67
    %v158 = vunpack.c.l.b16 %v68
    %v159 = vunpack.c.h.b16 %v68
    %v160 = vunpack.c.l.b16 %v69
    %v161 = vunpack.c.h.b16 %v69
    %v162 = vunpack.c.l.b16 %v70
    %v163 = vunpack.c.h.b16 %v70
    %v164 = vunpack.c.l.b16 %v71
    %v165 = vunpack.c.h.b16 %v71
    %v166 = vunpack.c.l.b16 %v72
    %v167 = vunpack.c.h.b16 %v72
    %v168 = vunpack.c.l.b16 %v73
    %v169 = vunpack.c.h.b16 %v73
    %v170 = vunpack.c.l.b16 %v74
    %v171 = vunpack.c.h.b16 %v74
    %v172 = vunpack.c.l.b16 %v75
    %v173 = vunpack.c.h.b16 %v75
    %v174 = vunpack.c.l.b16 %v76
    %v175 = vunpack.c.h.b16 %v76
    %v176 = vunpack.c.l.b16 %v77
    %v177 = vunpack.c.h.b16 %v77
    %v178 = vunpack.c.l.b16 %v78
    %v179 = vunpack.c.h.b16 %v78
    %v180 = vunpack.c.l.b16 %v79
    %v181 = vunpack.c.h.b16 %v79
    %v182 = vunpack.c.l.b16 %v80
    %v183 = vunpack.c.h.b16 %v80
    %v184 = vunpack.c.l.b16 %v81
    %v185 = vunpack.c.h.b16 %v81
    %v186 = vunpack.c.l.b16 %v82
    %v187 = vunpack.c.h.b16 %v82
    %v188 = vunpack.c.l.b16 %v83
    %v189 = vunpack.c.h.b16 %v83
    %v190 = vunpack.c.l.b16 %v84
    %v191 = vunpack.c.h.b16 %v84
    %v192 = vunpack.c.l.b16 %v85
    %v193 = vunpack.c.h.b16 %v85
    %v194 = vunpack.c.l.b16 %v86
    %v195 = vunpack.c.h.b16 %v86
    %v196 = vunpack.c.l.b16 %v87
    %v197 = vunpack.c.h.b16 %v87
    %v198 = vunpack.c.l.b16 %v88
    %v199 = vunpack.c.h.b16 %v88
    %v200 = vunpack.c.l.b16 %v89
    %v201 = vunpack.c.h.b16 %v89
    %v202 = vunpack.c.l.b16 %v90
    %v203 = vunpack.c.h.b16 %v90
    %v204 = vunpack.c.l.b16 %v91
    %v205 = vunpack.c.h.b16 %v91
    %v206 = vunpack.c.l.b16 %v92
    %v207 = vunpack.c.h.b16 %v92
    %v208 = vpack.c.b16 %v146, %v144
    %v209 = vpack.c.b16 %v147, %v145
    %v210 = vpack.c.b16 %v150, %v148
    %v211 = vpack.c.b16 %v151, %v149
    %v212 = vpack.c.b16 %v154, %v152
    %v213 = vpack.c.b16 %v155, %v153
    %v214 = vpack.c.b16 %v158, %v156
    %v215 = vpack.c.b16 %v159, %v157
    %v216 = vpack.c.b16 %v162, %v160
    %v217 = vpack.c.b16 %v163, %v161
    %v218 = vpack.c.b16 %v166, %v164
    %v219 = vpack.c.b16 %v167, %v165
    %v220 = vpack.c.b16 %v170, %v168
    %v221 = vpack.c.b16 %v171, %v169
    %v222 = vpack.c.b16 %v174, %v172
    %v223 = vpack.c.b16 %v175, %v173
    %v224 = vpack.c.b16 %v178, %v176
    %v225 = vpack.c.b16 %v179, %v177
    %v226 = vpack.c.b16 %v182, %v180
    %v227 = vpack.c.b16 %v183, %v181
    %v228 = vpack.c.b16 %v186, %v184
    %v229 = vpack.c.b16 %v187, %v185
    %v230 = vpack.c.b16 %v190, %v188
    %v231 = vpack.c.b16 %v191, %v189
    %v232 = vpack.c.b16 %v194, %v192
    %v233 = vpack.c.b16 %v195, %v193
    %v234 = vpack.c.b16 %v198, %v196
    %v235 = vpack.c.b16 %v199, %v197
    %v236 = vpack.c.b16 %v202, %v200
    %v237 = vpack.c.b16 %v203, %v201
    %v238 = vpack.c.b16 %v206, %v204
    %v239 = vpack.c.b16 %v207, %v205
    %272 = vmatprep.subr.bf16.mxu0 %v223
    %273 = vmatpush1.bf16.msra.mxu0 %v222
    %274 = vmatprep.subr.bf16.mxu0 %v221
    %275 = vmatpush1.bf16.msra.mxu0 %v220
    %276 = vmatprep.subr.bf16.mxu0 %v219
    %277 = vmatpush1.bf16.msra.mxu0 %v218
    %278 = vmatprep.subr.bf16.mxu0 %v217
    %279 = vmatpush1.bf16.msra.mxu0 %v216
    %280 = vmatprep.subr.bf16.mxu0 %v215
    %281 = vmatpush1.bf16.msra.mxu0 %v214
    %282 = vmatprep.subr.bf16.mxu0 %v213
    %283 = vmatpush1.bf16.msra.mxu0 %v212
    %284 = vmatprep.subr.bf16.mxu0 %v211
    %285 = vmatpush1.bf16.msra.mxu0 %v210
    %286 = vmatprep.subr.bf16.mxu0 %v209
    %287 = vmatpush1.bf16.msra.mxu0 %v208
    %288 = vmatprep.subr.bf16.mxu0 %v239
    %289 = vmatpush2.bf16.msra.mxu0 %v238
    %290 = vmatprep.subr.bf16.mxu0 %v237
    %291 = vmatpush2.bf16.msra.mxu0 %v236
    %292 = vmatprep.subr.bf16.mxu0 %v235
    %293 = vmatpush2.bf16.msra.mxu0 %v234
    %294 = vmatprep.subr.bf16.mxu0 %v233
    %295 = vmatpush2.bf16.msra.mxu0 %v232
    %296 = vmatprep.subr.bf16.mxu0 %v231
    %297 = vmatpush2.bf16.msra.mxu0 %v230
    %298 = vmatprep.subr.bf16.mxu0 %v229
    %299 = vmatpush2.bf16.msra.mxu0 %v228
    %300 = vmatprep.subr.bf16.mxu0 %v227
    %301 = vmatpush2.bf16.msra.mxu0 %v226
    %302 = vmatprep.subr.bf16.mxu0 %v225
    %303 = vmatpush2.bf16.msra.mxu0 %v224
    %304 = vmatprep.mubr.bf16.mxu0 %v109
    %305 = vmatmul.mubr.bf16.gmra.mxu0 %v108
    %v306 = vpop.f32.mrf.mxu0
    %v307 = vadd.f32 %v98, %v306
    %v308 = vpop.f32.mrf.mxu0
    %v309 = vadd.f32 %v102, %v308
    %v310 = vpop.f32.mrf.mxu0
    %v311 = vpop.f32.mrf.mxu0
    %312 = vdwg.mxu0
    %v313 = vmax.f32 %v307, 0.0
    %v314 = vmax.f32 %v309, 0.0
    %v315 = vpack.c.bf16 %v313, %v313
    %v316 = vpack.c.bf16 %v314, %v314
    %v317 = vld [vmem:[#allocation7] sm:$0xff]
    %v318 = vld [vmem:[#allocation7 + $0x8] sm:$0xff]
    %v319 = vld [vmem:[#allocation7 + $0x10] sm:$0xff]
    %v320 = vld [vmem:[#allocation7 + $0x18] sm:$0xff]
    %v321 = vld [vmem:[#allocation7 + $0x20] sm:$0xff]
    %v322 = vld [vmem:[#allocation7 + $0x28] sm:$0xff]
    %v323 = vld [vmem:[#allocation7 + $0x30] sm:$0xff]
    %v324 = vld [vmem:[#allocation7 + $0x38] sm:$0xff]
    %v325 = vld [vmem:[#allocation7 + $0x40] sm:$0xff]
    %v326 = vld [vmem:[#allocation7 + $0x48] sm:$0xff]
    %v327 = vld [vmem:[#allocation7 + $0x50] sm:$0xff]
    %v328 = vld [vmem:[#allocation7 + $0x58] sm:$0xff]
    %v329 = vld [vmem:[#allocation7 + $0x60] sm:$0xff]
    %v330 = vld [vmem:[#allocation7 + $0x68] sm:$0xff]
    %v331 = vld [vmem:[#allocation7 + $0x70] sm:$0xff]
    %v332 = vld [vmem:[#allocation7 + $0x78] sm:$0xff]
    %v333 = vld [vmem:[#allocation7 + $0x80] sm:$0xff]
    %v334 = vld [vmem:[#allocation7 + $0x88] sm:$0xff]
    %v335 = vld [vmem:[#allocation7 + $0x90] sm:$0xff]
    %v336 = vld [vmem:[#allocation7 + $0x98] sm:$0xff]
    %v337 = vld [vmem:[#allocation7 + $0xa0] sm:$0xff]
    %v338 = vld [vmem:[#allocation7 + $0xa8] sm:$0xff]
    %v339 = vld [vmem:[#allocation7 + $0xb0] sm:$0xff]
    %v340 = vld [vmem:[#allocation7 + $0xb8] sm:$0xff]
    %v341 = vld [vmem:[#allocation7 + $0xc0] sm:$0xff]
    %v342 = vld [vmem:[#allocation7 + $0xc8] sm:$0xff]
    %v343 = vld [vmem:[#allocation7 + $0xd0] sm:$0xff]
    %v344 = vld [vmem:[#allocation7 + $0xd8] sm:$0xff]
    %v345 = vld [vmem:[#allocation7 + $0xe0] sm:$0xff]
    %v346 = vld [vmem:[#allocation7 + $0xe8] sm:$0xff]
    %v347 = vld [vmem:[#allocation7 + $0xf0] sm:$0xff]
    %v348 = vld [vmem:[#allocation7 + $0xf8] sm:$0xff]
    %v349 = vld [vmem:[%s4] sm:$0x3]
    %v351 = vlaneseq
    %v352 = vshrl.u32 %v351, 7
    %v353 = vsub.s32 0, %v352
    %v354 = vrot.slane %v349, %v353
    %v355 = vlaneseq
    %v356 = vshrl.u32 %v355, 7
    %v357 = vsub.s32 1, %v356
    %v358 = vrot.slane %v349, %v357
    %v393 = vunpack.c.l.b16 %v317
    %v394 = vunpack.c.h.b16 %v317
    %v395 = vunpack.c.l.b16 %v318
    %v396 = vunpack.c.h.b16 %v318
    %v397 = vunpack.c.l.b16 %v319
    %v398 = vunpack.c.h.b16 %v319
    %v399 = vunpack.c.l.b16 %v320
    %v400 = vunpack.c.h.b16 %v320
    %v401 = vunpack.c.l.b16 %v321
    %v402 = vunpack.c.h.b16 %v321
    %v403 = vunpack.c.l.b16 %v322
    %v404 = vunpack.c.h.b16 %v322
    %v405 = vunpack.c.l.b16 %v323
    %v406 = vunpack.c.h.b16 %v323
    %v407 = vunpack.c.l.b16 %v324
    %v408 = vunpack.c.h.b16 %v324
    %v409 = vunpack.c.l.b16 %v325
    %v410 = vunpack.c.h.b16 %v325
    %v411 = vunpack.c.l.b16 %v326
    %v412 = vunpack.c.h.b16 %v326
    %v413 = vunpack.c.l.b16 %v327
    %v414 = vunpack.c.h.b16 %v327
    %v415 = vunpack.c.l.b16 %v328
    %v416 = vunpack.c.h.b16 %v328
    %v417 = vunpack.c.l.b16 %v329
    %v418 = vunpack.c.h.b16 %v329
    %v419 = vunpack.c.l.b16 %v330
    %v420 = vunpack.c.h.b16 %v330
    %v421 = vunpack.c.l.b16 %v331
    %v422 = vunpack.c.h.b16 %v331
    %v423 = vunpack.c.l.b16 %v332
    %v424 = vunpack.c.h.b16 %v332
    %v425 = vunpack.c.l.b16 %v333
    %v426 = vunpack.c.h.b16 %v333
    %v427 = vunpack.c.l.b16 %v334
    %v428 = vunpack.c.h.b16 %v334
    %v429 = vunpack.c.l.b16 %v335
    %v430 = vunpack.c.h.b16 %v335
    %v431 = vunpack.c.l.b16 %v336
    %v432 = vunpack.c.h.b16 %v336
    %v433 = vunpack.c.l.b16 %v337
    %v434 = vunpack.c.h.b16 %v337
    %v435 = vunpack.c.l.b16 %v338
    %v436 = vunpack.c.h.b16 %v338
    %v437 = vunpack.c.l.b16 %v339
    %v438 = vunpack.c.h.b16 %v339
    %v439 = vunpack.c.l.b16 %v340
    %v440 = vunpack.c.h.b16 %v340
    %v441 = vunpack.c.l.b16 %v341
    %v442 = vunpack.c.h.b16 %v341
    %v443 = vunpack.c.l.b16 %v342
    %v444 = vunpack.c.h.b16 %v342
    %v445 = vunpack.c.l.b16 %v343
    %v446 = vunpack.c.h.b16 %v343
    %v447 = vunpack.c.l.b16 %v344
    %v448 = vunpack.c.h.b16 %v344
    %v449 = vunpack.c.l.b16 %v345
    %v450 = vunpack.c.h.b16 %v345
    %v451 = vunpack.c.l.b16 %v346
    %v452 = vunpack.c.h.b16 %v346
    %v453 = vunpack.c.l.b16 %v347
    %v454 = vunpack.c.h.b16 %v347
    %v455 = vunpack.c.l.b16 %v348
    %v456 = vunpack.c.h.b16 %v348
    %v457 = vpack.c.b16 %v395, %v393
    %v458 = vpack.c.b16 %v396, %v394
    %v459 = vpack.c.b16 %v399, %v397
    %v460 = vpack.c.b16 %v400, %v398
    %v461 = vpack.c.b16 %v403, %v401
    %v462 = vpack.c.b16 %v404, %v402
    %v463 = vpack.c.b16 %v407, %v405
    %v464 = vpack.c.b16 %v408, %v406
    %v465 = vpack.c.b16 %v411, %v409
    %v466 = vpack.c.b16 %v412, %v410
    %v467 = vpack.c.b16 %v415, %v413
    %v468 = vpack.c.b16 %v416, %v414
    %v469 = vpack.c.b16 %v419, %v417
    %v470 = vpack.c.b16 %v420, %v418
    %v471 = vpack.c.b16 %v423, %v421
    %v472 = vpack.c.b16 %v424, %v422
    %v473 = vpack.c.b16 %v427, %v425
    %v474 = vpack.c.b16 %v428, %v426
    %v475 = vpack.c.b16 %v431, %v429
    %v476 = vpack.c.b16 %v432, %v430
    %v477 = vpack.c.b16 %v435, %v433
    %v478 = vpack.c.b16 %v436, %v434
    %v479 = vpack.c.b16 %v439, %v437
    %v480 = vpack.c.b16 %v440, %v438
    %v481 = vpack.c.b16 %v443, %v441
    %v482 = vpack.c.b16 %v444, %v442
    %v483 = vpack.c.b16 %v447, %v445
    %v484 = vpack.c.b16 %v448, %v446
    %v485 = vpack.c.b16 %v451, %v449
    %v486 = vpack.c.b16 %v452, %v450
    %v487 = vpack.c.b16 %v455, %v453
    %v488 = vpack.c.b16 %v456, %v454
    %521 = vmatprep.subr.bf16.mxu0 %v472
    %522 = vmatpush1.bf16.msra.mxu0 %v471
    %523 = vmatprep.subr.bf16.mxu0 %v470
    %524 = vmatpush1.bf16.msra.mxu0 %v469
    %525 = vmatprep.subr.bf16.mxu0 %v468
    %526 = vmatpush1.bf16.msra.mxu0 %v467
    %527 = vmatprep.subr.bf16.mxu0 %v466
    %528 = vmatpush1.bf16.msra.mxu0 %v465
    %529 = vmatprep.subr.bf16.mxu0 %v464
    %530 = vmatpush1.bf16.msra.mxu0 %v463
    %531 = vmatprep.subr.bf16.mxu0 %v462
    %532 = vmatpush1.bf16.msra.mxu0 %v461
    %533 = vmatprep.subr.bf16.mxu0 %v460
    %534 = vmatpush1.bf16.msra.mxu0 %v459
    %535 = vmatprep.subr.bf16.mxu0 %v458
    %536 = vmatpush1.bf16.msra.mxu0 %v457
    %537 = vmatprep.subr.bf16.mxu0 %v488
    %538 = vmatpush2.bf16.msra.mxu0 %v487
    %539 = vmatprep.subr.bf16.mxu0 %v486
    %540 = vmatpush2.bf16.msra.mxu0 %v485
    %541 = vmatprep.subr.bf16.mxu0 %v484
    %542 = vmatpush2.bf16.msra.mxu0 %v483
    %543 = vmatprep.subr.bf16.mxu0 %v482
    %544 = vmatpush2.bf16.msra.mxu0 %v481
    %545 = vmatprep.subr.bf16.mxu0 %v480
    %546 = vmatpush2.bf16.msra.mxu0 %v479
    %547 = vmatprep.subr.bf16.mxu0 %v478
    %548 = vmatpush2.bf16.msra.mxu0 %v477
    %549 = vmatprep.subr.bf16.mxu0 %v476
    %550 = vmatpush2.bf16.msra.mxu0 %v475
    %551 = vmatprep.subr.bf16.mxu0 %v474
    %552 = vmatpush2.bf16.msra.mxu0 %v473
    %553 = vmatprep.mubr.bf16.mxu0 %v316
    %554 = vmatmul.mubr.bf16.gmra.mxu0 %v315
    %v555 = vpop.f32.mrf.mxu0
    %v556 = vadd.f32 %v354, %v555
    %v557 = vpop.f32.mrf.mxu0
    %v558 = vadd.f32 %v358, %v557
    %v559 = vpop.f32.mrf.mxu0
    %v560 = vpop.f32.mrf.mxu0
    %561 = vdwg.mxu0
    %562 = vst [vmem:[#allocation8] sm:$0xff] %v556
    %563 = vst [vmem:[#allocation8 + $0x8] sm:$0xff] %v558
    // Predicated region
    $region34: #{tpu_custom_call.1} parent=1 // pred_check
      _
    $region35: #{tpu_custom_call.1} parent=1 // pred_check_branch
      %565 = sbr.rel (0) target = $region37
    $region36: #{tpu_custom_call.1} parent=1 // pred_region
      %s567 = ssub.s32 256, 256
      %568 = vsyncadd [#allocation4], %s567
      %s570 = sshll.u32 [#allocation8], 4
      %s571 = int_to_ptr.vmem [resolvable:$true] %s570
      %573 = dma.vmem_to_hbm [thread:$0]  %s571, 256, %s5, [#allocation4]
    $region37: #{tpu_custom_call.1} parent=1 // pred_fallthru
      _
    // Predicated region
    $region38: #{tpu_custom_call.1} parent=1 // pred_check
      _
    $region39: #{tpu_custom_call.1} parent=1 // pred_check_branch
      %575 = sbr.rel (0) target = $region41
    $region40: #{tpu_custom_call.1} parent=1 // pred_region
      %576 = dma.done [#allocation4], 256
    $region41: #{tpu_custom_call.1} parent=1 // pred_fallthru
      _
    %577 = vsyncpa [#allocation3], 1
    %578 = vsyncpa [#allocation6], 1
    %579 = vsyncpa [#allocation4], 1

</llo_original>
